<compile_context>
chip_gen: v6e
topology: v6e:2x2x1
jax: 0.10.0
libtpu: 0.0.40
codegen_flags: <defaults>
</compile_context>

<pallas_src>
import jax
import jax.numpy as jnp
from jax.experimental import pallas as pl
from jax.experimental.pallas import tpu as pltpu


def _h_swish_kernel(x_ref, o_ref):
    x = x_ref[...]
    # h_sigmoid(x) = relu6(x + 3) / 6 ; h_swish(x) = x * h_sigmoid(x).
    # Python-float constants keep the compute in the input dtype.
    hs = jnp.clip(x + 3.0, 0.0, 6.0) * (1.0 / 6.0)
    o_ref[...] = (x * hs).astype(o_ref.dtype)


_LANE = 128
_LANE_CANDIDATES = (8192, 4096, 2048, 1024, 512, 256, 128)


def _sublane_for(itemsize: int) -> int:
    # Minimum second-minor tiling: 8 rows for 32-bit, 16 for 16-bit, 32 for 8-bit.
    return {4: 8, 2: 16, 1: 32}.get(itemsize, 8)


def _largest_aligned_divisor(n: int, align: int, upper: int) -> int:
    """Largest d with d % align == 0, d | n, d <= upper. Assumes align | n."""
    d = min(upper, n)
    d = (d // align) * align
    while d > align:
        if n % d == 0:
            return d
        d -= align
    return align


def _run_slab(x2d: jax.Array, tile_rows: int, lanes: int) -> jax.Array:
    rows = x2d.shape[0]
    itemsize = jnp.dtype(x2d.dtype).itemsize
    n_elems = rows * lanes
    grid = (rows // tile_rows,)
    return pl.pallas_call(
        _h_swish_kernel,
        out_shape=jax.ShapeDtypeStruct((rows, lanes), x2d.dtype),
        grid_spec=pltpu.PrefetchScalarGridSpec(
            num_scalar_prefetch=0,
            grid=grid,
            in_specs=[pl.BlockSpec((tile_rows, lanes), lambda i: (i, 0))],
            out_specs=pl.BlockSpec((tile_rows, lanes), lambda i: (i, 0)),
        ),
        compiler_params=pltpu.CompilerParams(
            dimension_semantics=("parallel",)),
        cost_estimate=pl.CostEstimate(
            flops=5 * n_elems,
            transcendentals=0,
            bytes_accessed=2 * n_elems * itemsize),
    )(x2d)


def h_swish(x: jax.Array, *, target_tile_bytes: int = 2 * 1024 * 1024) -> jax.Array:
    """Elementwise h_swish matching the PyTorch module's forward pass."""
    orig_shape = x.shape
    dtype = x.dtype
    total = x.size
    if total == 0:
        return x

    itemsize = jnp.dtype(dtype).itemsize
    sublane = _sublane_for(itemsize)
    min_tile_elems = sublane * _LANE

    x_flat = x.reshape(-1)

    if total % min_tile_elems == 0:
        # Common path (typical conv activations): no pad, no trailing slice.
        # Pick the widest lane extent that keeps rows sublane-aligned.
        lanes = _LANE
        for w in _LANE_CANDIDATES:
            if total % w == 0 and (total // w) % sublane == 0:
                lanes = w
                break
        rows = total // lanes
        target_rows = max(sublane, target_tile_bytes // (lanes * itemsize))
        if rows >= 2 * sublane:
            # Keep at least 2 grid steps so the parallel axis can shard
            # across v7x's two TensorCores.
            upper = min(target_rows, rows // 2)
        else:
            upper = target_rows
        tile_rows = _largest_aligned_divisor(rows, sublane, upper)
        out2d = _run_slab(x_flat.reshape(rows, lanes), tile_rows, lanes)
        return out2d.reshape(orig_shape)

    # Fallback path (odd element counts): choose the tile first, pad directly
    # up to a whole number of tiles (exact tiling, no silent tile shrinkage),
    # compute, then slice back.
    lanes = _LANE
    rows = pl.cdiv(total, lanes)
    target_rows = max(sublane, target_tile_bytes // (lanes * itemsize))
    tile_rows = min(target_rows, pl.cdiv(rows, sublane) * sublane)
    tile_rows = max(sublane, (tile_rows // sublane) * sublane)
    padded_rows = pl.cdiv(rows, tile_rows) * tile_rows
    x_flat = jnp.pad(x_flat, (0, padded_rows * lanes - total))
    out2d = _run_slab(x_flat.reshape(padded_rows, lanes), tile_rows, lanes)
    return out2d.reshape(-1)[:total].reshape(orig_shape)


def h_swish_ref(x):
    return x * (jnp.clip(x + 3.0, 0.0, 6.0) / 6.0)


if __name__ == "__main__":
    key = jax.random.PRNGKey(0)

    # Small NCHW input consistent with typical usage of h_swish in conv nets.
    x = jax.random.normal(key, (2, 4, 16, 16), dtype=jnp.float32) * 4.0
    y = jax.block_until_ready(h_swish(x))
    y_ref = h_swish_ref(x)
    assert y.shape == x.shape and y.dtype == x.dtype
    assert jnp.allclose(y, y_ref, atol=1e-5, rtol=1e-6), "f32 mismatch vs reference"

    # Exercise the padded fallback path (element count not a multiple of 8*128).
    x_odd = jax.random.normal(jax.random.PRNGKey(1), (3, 5, 7), dtype=jnp.float32) * 4.0
    y_odd = jax.block_until_ready(h_swish(x_odd))
    assert y_odd.shape == x_odd.shape and y_odd.dtype == x_odd.dtype
    assert jnp.allclose(y_odd, h_swish_ref(x_odd), atol=1e-5, rtol=1e-6), \
        "odd-shape mismatch vs reference"

    # bf16 path (dtype-aware sublane alignment, compute stays in bf16).
    x_bf16 = (jax.random.normal(jax.random.PRNGKey(2), (2, 8, 16, 16),
                                dtype=jnp.float32) * 4.0).astype(jnp.bfloat16)
    y_bf16 = jax.block_until_ready(h_swish(x_bf16))
    assert y_bf16.shape == x_bf16.shape and y_bf16.dtype == jnp.bfloat16
    assert jnp.allclose(y_bf16.astype(jnp.float32),
                        h_swish_ref(x_bf16.astype(jnp.float32)),
                        atol=5e-2, rtol=5e-2), "bf16 mismatch vs reference"

    print("KERNEL_OK")
</pallas_src>

<mosaic_0001>
module attributes {stable_mosaic.version = 11 : i64} {
  func.func @_h_swish_kernel(%arg0: i32, %arg1: memref<8x256xf32, #tpu.memory_space<vmem>>, %arg2: memref<8x256xf32, #tpu.memory_space<vmem>>) attributes {dimension_semantics = [#tpu.dimension_semantics<parallel>], iteration_bounds = array<i64: 1>, scalar_prefetch = 0 : i64, scratch_operands = 0 : i64, tpu.core_type = #tpu.core_type<tc>, window_params = [{transform_indices = @transform_0, window_bounds = array<i64: 8, 256>}, {transform_indices = @transform_1, window_bounds = array<i64: 8, 256>}]} {
    %c0 = arith.constant 0 : index
    %c0_0 = arith.constant 0 : index
    %0 = vector.load %arg1[%c0, %c0_0] : memref<8x256xf32, #tpu.memory_space<vmem>>, vector<8x256xf32>
    %cst = arith.constant 3.000000e+00 : f32
    %1 = vector.broadcast %cst : f32 to vector<8x256xf32>
    %2 = arith.addf %0, %1 : vector<8x256xf32>
    %cst_1 = arith.constant 0.000000e+00 : f32
    %cst_2 = arith.constant 6.000000e+00 : f32
    %3 = vector.broadcast %cst_1 : f32 to vector<8x256xf32>
    %4 = arith.maximumf %3, %2 : vector<8x256xf32>
    %5 = vector.broadcast %cst_2 : f32 to vector<8x256xf32>
    %6 = arith.minimumf %5, %4 : vector<8x256xf32>
    %cst_3 = arith.constant 0.166666672 : f32
    %7 = vector.broadcast %cst_3 : f32 to vector<8x256xf32>
    %8 = arith.mulf %6, %7 : vector<8x256xf32>
    %9 = arith.mulf %0, %8 : vector<8x256xf32>
    %c0_4 = arith.constant 0 : index
    %c0_5 = arith.constant 0 : index
    %10 = vector.load %arg2[%c0_4, %c0_5] : memref<8x256xf32, #tpu.memory_space<vmem>>, vector<8x256xf32>
    tpu.vector_store %arg2[%c0_4, %c0_5], %9 {strides = array<i32>} : memref<8x256xf32, #tpu.memory_space<vmem>>, vector<8x256xf32>,
    return
  }
  func.func @transform_0(%arg0: i32) -> (i32, i32) {
    %c0_i32 = arith.constant 0 : i32
    %c0_i32_0 = arith.constant 0 : i32
    return %arg0, %c0_i32 : i32, i32
  }
  func.func @transform_1(%arg0: i32) -> (i32, i32) {
    %c0_i32 = arith.constant 0 : i32
    %c0_i32_0 = arith.constant 0 : i32
    return %arg0, %c0_i32 : i32, i32
  }
}

</mosaic_0001>

<llo_original>
// kernel: tpu_custom_call.1
$region0: #{tpu_custom_call.1}
  #allocation0 [shape = 'u32[]', space=smem, size = 0x4, offset = 0x4, fixed_abs, tag = 'smem constant byte address 0x4 - core index']
  #allocation1 [shape = 'u32[144,128]{1,0:T(1,128)}', space=vmem, size = 0x12000, scoped, tag = 'internal scratch']
  %s0 = inlined_call_operand.hbm [shape: f32[8,256], index: 0, kind: input, shape index: {}]
  %s1 = inlined_call_operand.hbm [shape: f32[8,256], index: 1, kind: output, shape index: {}]
  %s2 = sld [smem:[#allocation0]]
  $region18: #{tpu_custom_call.1} parent=0
    _
  %s4 = ssub.s32 1, %s2
  %s5 = scalar_select 0, %s4, %s2
  $region1: #{tpu_custom_call.1} parent=0
    #allocation2 [shape = 'u8[8192]{0}', space=vmem, size = 0x2000, scoped, tag = 'input window, operand 0, single buffered']
    #allocation3 [shape = 's32[1]{0}', space=sflag, size = 0x4, scoped, tag = 'scoped memory for tpu_custom_call.1']
    #allocation4 [shape = 's32[1]{0}', space=sflag, size = 0x4, scoped, tag = 'scoped memory for tpu_custom_call.1']
    #allocation5 [shape = 'u8[8192]{0}', space=vmem, size = 0x2000, scoped, tag = 'output window, operand 0, single buffered']
    %6 = vsyncpa [#allocation3], 0
    %7 = vsyncpa [#allocation4], 0
    // Predicated region
    $region2: #{tpu_custom_call.1} parent=1 // pred_check
      _
    $region3: #{tpu_custom_call.1} parent=1 // pred_check_branch
      %9 = sbr.rel (0) target = $region5
    $region4: #{tpu_custom_call.1} parent=1 // pred_region
      %s11 = ssub.s32 256, 256
      %12 = vsyncadd [#allocation3], %s11
      %s14 = sshll.u32 [#allocation2], 4
      %s15 = int_to_ptr.vmem [resolvable:$true] %s14
      %17 = dma.hbm_to_vmem [thread:$0]  %s0, 256, %s15, [#allocation3]
    $region5: #{tpu_custom_call.1} parent=1 // pred_fallthru
      _
    // Predicated region
    $region6: #{tpu_custom_call.1} parent=1 // pred_check
      _
    $region7: #{tpu_custom_call.1} parent=1 // pred_check_branch
      %19 = sbr.rel (0) target = $region9
    $region8: #{tpu_custom_call.1} parent=1 // pred_region
      %20 = dma.done [#allocation3], 256
    $region9: #{tpu_custom_call.1} parent=1 // pred_fallthru
      _
    %v21 = vld [vmem:[#allocation2] sm:$0xff]
    %v22 = vld [vmem:[#allocation2 + $0x8] sm:$0xff]
    %v23 = vadd.f32 %v21, 3.0
    %v24 = vadd.f32 %v22, 3.0
    %v25 = vmax.f32 %v23, 0.0
    %v26 = vmax.f32 %v24, 0.0
    %v27 = vmin.f32 %v25, 6.0
    %v28 = vmin.f32 %v26, 6.0
    %v29 = vmul.f32 %v27, 0.16666667
    %v30 = vmul.f32 %v28, 0.16666667
    %v31 = vmul.f32 %v21, %v29
    %v32 = vmul.f32 %v22, %v30
    %33 = vst [vmem:[#allocation5] sm:$0xff] %v31
    %34 = vst [vmem:[#allocation5 + $0x8] sm:$0xff] %v32
    // Predicated region
    $region10: #{tpu_custom_call.1} parent=1 // pred_check
      _
    $region11: #{tpu_custom_call.1} parent=1 // pred_check_branch
      %36 = sbr.rel (0) target = $region13
    $region12: #{tpu_custom_call.1} parent=1 // pred_region
      %s38 = ssub.s32 256, 256
      %39 = vsyncadd [#allocation4], %s38
      %s41 = sshll.u32 [#allocation5], 4
      %s42 = int_to_ptr.vmem [resolvable:$true] %s41
      %44 = dma.vmem_to_hbm [thread:$0]  %s42, 256, %s1, [#allocation4]
    $region13: #{tpu_custom_call.1} parent=1 // pred_fallthru
      _
    // Predicated region
    $region14: #{tpu_custom_call.1} parent=1 // pred_check
      _
    $region15: #{tpu_custom_call.1} parent=1 // pred_check_branch
      %46 = sbr.rel (0) target = $region17
    $region16: #{tpu_custom_call.1} parent=1 // pred_region
      %47 = dma.done [#allocation4], 256
    $region17: #{tpu_custom_call.1} parent=1 // pred_fallthru
      _
    %48 = vsyncpa [#allocation3], 1
    %49 = vsyncpa [#allocation4], 1

</llo_original>
